<compile_context>
chip_gen: v5e
topology: v5e:2x2
jax: 0.10.0
libtpu: 0.0.40
codegen_flags: <defaults>
</compile_context>

<pallas_src>
import jax
import jax.numpy as jnp
from jax.experimental import pallas as pl
from jax.experimental.pallas import tpu as pltpu

# Module-level constants from pysmore/MF_BPR.py
K = 10   # latent dim
M = 20   # number of items
N = 10   # number of users


def _round_up(x, m):
    return ((x + m - 1) // m) * m


def _mf_forward_kernel(u_ref, it_ref, o_ref):
    # u_ref:  (TN, Kp)  user tile        (K on lanes)
    # it_ref: (Kp, TM)  item tile, pre-transposed (K on sublanes, M on lanes)
    # o_ref:  (TN, TM)  score tile (f32) -- lane-dense, unmasked stores
    o_ref[...] = jnp.dot(
        u_ref[...], it_ref[...], preferred_element_type=jnp.float32
    )


def mf_forward_pallas(U, I, *, tn=512, tm=1024):
    """Compute U @ I.T with a tiled Pallas TPU kernel.

    U: (N, K) float32, I: (M, K) float32 -> (N, M) float32.
    """
    n, k = U.shape
    m, k2 = I.shape
    assert k == k2, "latent dims must match"

    # Pre-transpose items once in the wrapper (layout plumbing, not compute).
    I_t = I.T  # (K, M)

    # One-time padding to layout-friendly sizes:
    #   - TN: multiple of 8 (sublane), TM: multiple of 128 (lane-dense output),
    #   - K padded to a multiple of 8 (extra zero columns contribute nothing).
    tn = min(tn, _round_up(n, 8))
    tm = min(tm, _round_up(m, 128))
    kp = _round_up(k, 8)
    n_pad = _round_up(n, tn)
    m_pad = _round_up(m, tm)

    U_p = jnp.pad(U.astype(jnp.float32), ((0, n_pad - n), (0, kp - k)))
    I_tp = jnp.pad(I_t.astype(jnp.float32), ((0, kp - k), (0, m_pad - m)))

    grid = (n_pad // tn, m_pad // tm)

    cost = pl.CostEstimate(
        flops=2 * n_pad * m_pad * kp,
        transcendentals=0,
        bytes_accessed=4 * (n_pad * kp + kp * m_pad + n_pad * m_pad),
    )

    out = pl.pallas_call(
        _mf_forward_kernel,
        out_shape=jax.ShapeDtypeStruct((n_pad, m_pad), jnp.float32),
        grid=grid,
        in_specs=[
            pl.BlockSpec((tn, kp), lambda i, j: (i, 0)),   # user tile
            pl.BlockSpec((kp, tm), lambda i, j: (0, j)),   # item tile (K, TM)
        ],
        out_specs=pl.BlockSpec((tn, tm), lambda i, j: (i, j)),
        compiler_params=pltpu.CompilerParams(
            dimension_semantics=("parallel", "parallel"),
        ),
        cost_estimate=cost,
    )(U_p, I_tp)

    return out[:n, :m]


def mf_forward(U, I):
    """Forward pass of MF: scores = U @ I.T.

    For tiny problems the entire output is a few KiB and pallas_call launch /
    DMA setup dominates, so dispatch to a fused XLA dot; use the tiled Pallas
    kernel once the output is big enough for tiling/pipelining to matter.
    """
    n, _ = U.shape
    m, _ = I.shape
    if n * m < 256 * 256:
        return jnp.dot(U, I.T, preferred_element_type=jnp.float32)
    return mf_forward_pallas(U, I)


if __name__ == "__main__":
    # Deterministic parameter init mirroring torch.randn(N, K) / torch.randn(M, K).
    key = jax.random.PRNGKey(0)
    ku, ki, ku2, ki2 = jax.random.split(key, 4)
    U = jax.random.normal(ku, (N, K), dtype=jnp.float32)
    I = jax.random.normal(ki, (M, K), dtype=jnp.float32)

    # TODO(synk): bpr_update() (data-dependent single-row sparse SGD driven by
    # the Net sampler / net.dat file) is training-side state mutation, not part
    # of forward(); it is not implemented here.

    # 1) Exercise the Pallas kernel at the module's small shapes (single tile,
    #    padded to (16, 128) internally, sliced back to (N, M)).
    out = mf_forward_pallas(U, I)
    out = jax.block_until_ready(out)
    ref = U @ I.T
    assert out.shape == (N, M)
    assert jnp.allclose(out, ref, atol=1e-5, rtol=1e-5), "mismatch vs reference"

    # 2) Exercise the multi-tile 2D grid (3 x 3 tiles) with small explicit
    #    tile sizes to validate padding + tiling + parallel grid semantics.
    N2, M2 = 24, 300
    U2 = jax.random.normal(ku2, (N2, K), dtype=jnp.float32)
    I2 = jax.random.normal(ki2, (M2, K), dtype=jnp.float32)
    out2 = mf_forward_pallas(U2, I2, tn=8, tm=128)
    out2 = jax.block_until_ready(out2)
    ref2 = U2 @ I2.T
    assert out2.shape == (N2, M2)
    assert jnp.allclose(out2, ref2, atol=1e-5, rtol=1e-5), "mismatch vs reference (tiled)"

    # 3) Dispatch path (tiny shapes -> fused XLA dot) still matches.
    out3 = jax.block_until_ready(mf_forward(U, I))
    assert jnp.allclose(out3, ref, atol=1e-5, rtol=1e-5)

    print("KERNEL_OK")
</pallas_src>

<mosaic_0001>
module attributes {stable_mosaic.version = 11 : i64} {
  func.func @_mf_forward_kernel(%arg0: i32, %arg1: i32, %arg2: memref<16x16xf32, #tpu.memory_space<vmem>>, %arg3: memref<16x128xf32, #tpu.memory_space<vmem>>, %arg4: memref<16x128xf32, #tpu.memory_space<vmem>>) attributes {dimension_semantics = [#tpu.dimension_semantics<parallel>, #tpu.dimension_semantics<parallel>], iteration_bounds = array<i64: 1, 1>, scalar_prefetch = 0 : i64, scratch_operands = 0 : i64, tpu.core_type = #tpu.core_type<tc>, window_params = [{transform_indices = @transform_0, window_bounds = array<i64: 16, 16>}, {transform_indices = @transform_1, window_bounds = array<i64: 16, 128>}, {transform_indices = @transform_2, window_bounds = array<i64: 16, 128>}]} {
    %c0 = arith.constant 0 : index
    %c0_0 = arith.constant 0 : index
    %0 = vector.load %arg2[%c0, %c0_0] : memref<16x16xf32, #tpu.memory_space<vmem>>, vector<16x16xf32>
    %c0_1 = arith.constant 0 : index
    %c0_2 = arith.constant 0 : index
    %1 = vector.load %arg3[%c0_1, %c0_2] : memref<16x128xf32, #tpu.memory_space<vmem>>, vector<16x128xf32>
    %cst = arith.constant dense<0.000000e+00> : vector<16x128xf32>
    %2 = tpu.matmul %0, %1, %cst {dimension_numbers = #tpu.dot_dimension_numbers<[1], [0], [0], [1], [0, 0, 1, 1], [], []>} : vector<16x16xf32>, vector<16x128xf32>, vector<16x128xf32> -> vector<16x128xf32>
    %c0_3 = arith.constant 0 : index
    %c0_4 = arith.constant 0 : index
    %3 = vector.load %arg4[%c0_3, %c0_4] : memref<16x128xf32, #tpu.memory_space<vmem>>, vector<16x128xf32>
    tpu.vector_store %arg4[%c0_3, %c0_4], %2 {strides = array<i32>} : memref<16x128xf32, #tpu.memory_space<vmem>>, vector<16x128xf32>,
    return
  }
  func.func @transform_0(%arg0: i32, %arg1: i32) -> (i32, i32) {
    %c0_i32 = arith.constant 0 : i32
    %c0_i32_0 = arith.constant 0 : i32
    return %arg0, %c0_i32 : i32, i32
  }
  func.func @transform_1(%arg0: i32, %arg1: i32) -> (i32, i32) {
    %c0_i32 = arith.constant 0 : i32
    %c0_i32_0 = arith.constant 0 : i32
    return %c0_i32, %arg1 : i32, i32
  }
  func.func @transform_2(%arg0: i32, %arg1: i32) -> (i32, i32) {
    %c0_i32 = arith.constant 0 : i32
    return %arg0, %arg1 : i32, i32
  }
}

</mosaic_0001>

<llo_original>
// kernel: tpu_custom_call.1
$region0: #{tpu_custom_call.1}
  #allocation0 [shape = 'u32[]', space=smem, size = 0x4, offset = 0x4, fixed_abs, tag = 'smem constant byte address 0x4 - core index']
  #allocation1 [shape = 'u32[72,128]{1,0:T(1,128)}', space=vmem, size = 0x9000, scoped, tag = 'internal scratch']
  %s0 = inlined_call_operand.hbm [shape: f32[16,16], index: 0, kind: input, shape index: {}]
  %s1 = inlined_call_operand.hbm [shape: f32[16,128], index: 1, kind: input, shape index: {}]
  %s2 = inlined_call_operand.hbm [shape: f32[16,128], index: 2, kind: output, shape index: {}]
  %s3 = sld [smem:[#allocation0]]
  $region26: #{tpu_custom_call.1} parent=0
    _
  %s5 = ssub.s32 1, %s3
  %s6 = scalar_select 0, %s5, %s3
  $region1: #{tpu_custom_call.1} parent=0
    #allocation2 [shape = 'u8[8192]{0}', space=vmem, size = 0x2000, scoped, tag = 'input window, operand 0, single buffered']
    #allocation3 [shape = 's32[1]{0}', space=sflag, size = 0x4, scoped, tag = 'scoped memory for tpu_custom_call.1']
    #allocation4 [shape = 's32[1]{0}', space=sflag, size = 0x4, scoped, tag = 'scoped memory for tpu_custom_call.1']
    #allocation5 [shape = 'u8[8192]{0}', space=vmem, size = 0x2000, scoped, tag = 'input window, operand 1, single buffered']
    #allocation6 [shape = 's32[1]{0}', space=sflag, size = 0x4, scoped, tag = 'scoped memory for tpu_custom_call.1']
    #allocation7 [shape = 'u8[8192]{0}', space=vmem, size = 0x2000, scoped, tag = 'output window, operand 0, single buffered']
    %7 = vsyncpa [#allocation3], 0
    %8 = vsyncpa [#allocation6], 0
    %9 = vsyncpa [#allocation4], 0
    // Predicated region
    $region2: #{tpu_custom_call.1} parent=1 // pred_check
      _
    $region3: #{tpu_custom_call.1} parent=1 // pred_check_branch
      %11 = sbr.rel (0) target = $region5
    $region4: #{tpu_custom_call.1} parent=1 // pred_region
      %13 = vsyncadd [#allocation3], 0
      %s14 = sshll.u32 %s0, 4
      %s15 = int_to_ptr.hbm [resolvable:$true] %s14
      %s16 = sshll.u32 [#allocation2], 4
      %s17 = int_to_ptr.vmem [resolvable:$true] %s16
      %22 = dma.hbm_to_vmem [thread:$0]  %s15, 256, %s17, [#allocation3], 128, 128, 8
    $region5: #{tpu_custom_call.1} parent=1 // pred_fallthru
      _
    // Predicated region
    $region6: #{tpu_custom_call.1} parent=1 // pred_check
      _
    $region7: #{tpu_custom_call.1} parent=1 // pred_check_branch
      %24 = sbr.rel (0) target = $region9
    $region8: #{tpu_custom_call.1} parent=1 // pred_region
      %26 = vsyncadd [#allocation6], 0
      %s27 = sshll.u32 %s1, 4
      %s28 = int_to_ptr.hbm [resolvable:$true] %s27
      %s29 = sshll.u32 [#allocation5], 4
      %s30 = int_to_ptr.vmem [resolvable:$true] %s29
      %35 = dma.hbm_to_vmem [thread:$0]  %s28, 256, %s30, [#allocation6], 128, 128, 8
    $region9: #{tpu_custom_call.1} parent=1 // pred_fallthru
      _
    // Predicated region
    $region10: #{tpu_custom_call.1} parent=1 // pred_check
      _
    $region11: #{tpu_custom_call.1} parent=1 // pred_check_branch
      %37 = sbr.rel (0) target = $region13
    $region12: #{tpu_custom_call.1} parent=1 // pred_region
      %39 = dma.done [#allocation3], 256
    $region13: #{tpu_custom_call.1} parent=1 // pred_fallthru
      _
    // Predicated region
    $region14: #{tpu_custom_call.1} parent=1 // pred_check
      _
    $region15: #{tpu_custom_call.1} parent=1 // pred_check_branch
      %41 = sbr.rel (0) target = $region17
    $region16: #{tpu_custom_call.1} parent=1 // pred_region
      %43 = dma.done [#allocation6], 256
    $region17: #{tpu_custom_call.1} parent=1 // pred_fallthru
      _
    %v44 = vld [vmem:[#allocation2] sm:$0xff]
    %v45 = vld [vmem:[#allocation2 + $0x8] sm:$0xff]
    %v46 = vld [vmem:[#allocation5] sm:$0xff]
    %v47 = vld [vmem:[#allocation5 + $0x8] sm:$0xff]
    %vm48 = vcmask 130048
    %v50 = vsel %vm48, %v44, 0
    %v53 = vsel %vm48, %v45, 0
    %55 = vmatpush.msra.mxu0 0.0
    %56 = vmatpush.msra.mxu0 0.0
    %57 = vmatpush.msra.mxu0 0.0
    %58 = vmatpush.msra.mxu0 0.0
    %59 = vmatpush.msra.mxu0 0.0
    %60 = vmatpush.msra.mxu0 0.0
    %61 = vmatpush.msra.mxu0 0.0
    %62 = vmatpush.msra.mxu0 0.0
    %63 = vmatpush.msra.mxu0 0.0
    %64 = vmatpush.msra.mxu0 0.0
    %65 = vmatpush.msra.mxu0 0.0
    %66 = vmatpush.msra.mxu0 0.0
    %67 = vmatpush.msra.mxu0 0.0
    %68 = vmatpush.msra.mxu0 0.0
    %69 = vmatpush.msra.mxu0 %v47
    %70 = vmatpush.msra.mxu0 %v46
    %71 = vmatmul.f32.gmra.mxu0 %v50
    %v72 = vpop.f32.mrf.mxu0
    %v73 = vadd.f32 0.0, %v72
    %74 = vmatmul.f32.gmra.mxu0 %v53
    %v75 = vpop.f32.mrf.mxu0
    %v76 = vadd.f32 0.0, %v75
    %77 = vdwg.mxu0
    %78 = vst [vmem:[#allocation7] sm:$0xff] %v73
    %79 = vst [vmem:[#allocation7 + $0x8] sm:$0xff] %v76
    // Predicated region
    $region18: #{tpu_custom_call.1} parent=1 // pred_check
      _
    $region19: #{tpu_custom_call.1} parent=1 // pred_check_branch
      %81 = sbr.rel (0) target = $region21
    $region20: #{tpu_custom_call.1} parent=1 // pred_region
      %83 = vsyncadd [#allocation4], 0
      %s84 = sshll.u32 [#allocation7], 4
      %s85 = int_to_ptr.vmem [resolvable:$true] %s84
      %s86 = sshll.u32 %s2, 4
      %s87 = int_to_ptr.hbm [resolvable:$true] %s86
      %92 = dma.vmem_to_hbm [thread:$0]  %s85, 256, %s87, [#allocation4], 128, 128, 8
    $region21: #{tpu_custom_call.1} parent=1 // pred_fallthru
      _
    // Predicated region
    $region22: #{tpu_custom_call.1} parent=1 // pred_check
      _
    $region23: #{tpu_custom_call.1} parent=1 // pred_check_branch
      %94 = sbr.rel (0) target = $region25
    $region24: #{tpu_custom_call.1} parent=1 // pred_region
      %96 = dma.done [#allocation4], 256
    $region25: #{tpu_custom_call.1} parent=1 // pred_fallthru
      _
    %97 = vsyncpa [#allocation3], 1
    %98 = vsyncpa [#allocation6], 1
    %99 = vsyncpa [#allocation4], 1

</llo_original>
